<compile_context>
chip_gen: v7x
topology: tpu7x:2x2x1
jax: 0.10.0
libtpu: 0.0.40
codegen_flags: <defaults>
</compile_context>

<pallas_src>
import math

import jax
import jax.numpy as jnp
from jax.experimental import pallas as pl
from jax.experimental.pallas import tpu as pltpu


# Below this total size a materialized copy is pure loss vs. the ~us-scale
# pallas_call overhead; fall back to the free metadata reshape.
_MIN_COPY_BYTES = 4 * 1024 * 1024


def _copy_kernel(x_ref, o_ref):
    # Pure data movement: copy one lane-dense (row_block, lanes) tile.
    o_ref[...] = x_ref[...]


def _hw_config():
    """(target_block_bytes, vmem_limit_bytes), sized per TPU generation."""
    try:
        info = pltpu.get_tpu_info()
        vmem_cap = int(getattr(info, "vmem_capacity_bytes", 0)) or (64 << 20)
    except Exception:
        vmem_cap = 64 << 20  # conservative: assume v7x-sized VMEM
    if vmem_cap >= (128 << 20):
        # v5e / v6e: 128 MiB physical VMEM -> bigger blocks, fewer grid steps.
        return 16 << 20, 96 << 20
    # v7x: 64 MiB physical VMEM. 4 live buffers * 8 MiB = 32 MiB < 48 MiB.
    return 8 << 20, 48 << 20


def _choose_tiling(total, itemsize, target_block_bytes):
    """Pick a lane-dense (rows, lanes) slab view and a row-block size.

    Returns (rows, lanes, row_block) or None if no well-aligned tiling exists
    (caller then falls back to the free metadata reshape).
    """
    lanes = None
    for cand in (1024, 512, 256, 128):  # lane dim must be a multiple of 128
        if total % cand == 0:
            lanes = cand
            break
    if lanes is None:
        return None
    rows = total // lanes

    # dtype-aware sublane granularity: f32 -> 8, bf16 -> 16, int8/fp8 -> 32
    # (sub-32-bit dtypes pack along sublanes; smaller blocks give padded
    # vregs / masked stores or fail to lower).
    sub = 8 * max(1, 4 // itemsize)

    row_bytes = lanes * itemsize
    max_rows = max(sub, target_block_bytes // row_bytes)
    whole_bytes = rows * row_bytes

    if rows % sub != 0 or rows // sub < 2:
        # Cannot split into >=2 aligned blocks.  A whole-slab single block
        # (block == full dims satisfies the (8,128) rule) is acceptable only
        # if it double-buffers comfortably.
        if 4 * whole_bytes <= (32 << 20):
            return rows, lanes, rows
        return None

    # Largest aligned divisor of `rows` under the target block size; prefer
    # an even grid-step count (balances the 2 TensorCores on v7x), then any
    # aligned divisor.
    start = (min(max_rows, rows // 2) // sub) * sub
    for require_even in (True, False):
        rb = start
        while rb >= sub:
            if rows % rb == 0 and (not require_even or (rows // rb) % 2 == 0):
                return rows, lanes, rb
            rb -= sub

    if 4 * whole_bytes <= (32 << 20):
        return rows, lanes, rows
    return None


def _resolve_out_shape(x, shape):
    """Torch-style target-shape resolution (single -1 allowed)."""
    b = x.shape[0]
    feat = math.prod(x.shape[1:])
    shape = list(shape)
    if shape.count(-1) == 1:
        known = math.prod(d for d in shape if d != -1)
        if known <= 0 or feat % known != 0:
            raise ValueError(f"cannot infer -1 in {tuple(shape)} from {feat} features")
        shape[shape.index(-1)] = feat // known
    elif shape.count(-1) > 1:
        raise ValueError("at most one -1 allowed in target shape")
    if math.prod(shape) != feat:
        raise ValueError(
            f"cannot reshape {feat} per-sample elements into {tuple(shape)}")
    return (b,) + tuple(shape)


def reshape_pallas(x, shape, *, materialize=False,
                   min_copy_bytes=_MIN_COPY_BYTES, alias_input=False):
    """Equivalent of Reshape(shape)(x): x.reshape(len(x), *shape).

    materialize=False (default): free metadata reshape (roofline-optimal).
    materialize=True: force an explicit HBM copy through a Pallas kernel
    (only useful when a physically distinct buffer is required).
    """
    out_shape = _resolve_out_shape(x, shape)

    if not materialize:
        # Reshape is pure metadata: this is the optimal implementation.
        return x.reshape(out_shape)

    total = x.size
    itemsize = jnp.dtype(x.dtype).itemsize
    if total == 0 or total * itemsize < min_copy_bytes:
        return x.reshape(out_shape)

    block_bytes, vmem_limit = _hw_config()
    tiling = _choose_tiling(total, itemsize, block_bytes)
    if tiling is None:
        # Unaligned / pathological sizes: metadata reshape instead of a
        # VMEM-blowing whole-array block.
        return x.reshape(out_shape)

    rows, lanes, rb = tiling
    # Row-major flatten: identical element order to torch's .reshape.
    slab = x.reshape(rows, lanes)

    extra = {"input_output_aliases": {0: 0}} if alias_input else {}
    out_flat = pl.pallas_call(
        _copy_kernel,
        out_shape=jax.ShapeDtypeStruct((rows, lanes), x.dtype),
        grid_spec=pltpu.PrefetchScalarGridSpec(
            num_scalar_prefetch=0,
            grid=(rows // rb,),
            in_specs=[pl.BlockSpec((rb, lanes), lambda i: (i, 0))],
            out_specs=pl.BlockSpec((rb, lanes), lambda i: (i, 0)),
        ),
        compiler_params=pltpu.CompilerParams(
            # Independent row blocks: shard across both TensorCores on v7x.
            dimension_semantics=("parallel",),
            vmem_limit_bytes=vmem_limit,
        ),
        cost_estimate=pl.CostEstimate(
            flops=0,
            transcendentals=0,
            bytes_accessed=2 * total * itemsize,
        ),
        **extra,
    )(slab)

    return out_flat.reshape(out_shape)


class ReshapeModule:
    """Thin wrapper mirroring the PyTorch nn.Module interface."""

    def __init__(self, shape, materialize=False):
        self._shape = tuple(shape)
        self._materialize = materialize

    def __call__(self, x):
        return reshape_pallas(x, self._shape, materialize=self._materialize)


if __name__ == "__main__":
    key = jax.random.PRNGKey(0)
    # Input consistent with a conv feature map: NCHW = (2, 4, 16, 16)
    x = jax.random.normal(key, (2, 4, 16, 16), dtype=jnp.float32)
    ref = x.reshape(x.shape[0], 16, 64)

    # 1) Default module path: free metadata reshape (no kernel launched).
    mod = ReshapeModule((16, 64))
    out = jax.block_until_ready(mod(x))
    assert out.shape == (2, 16, 64), out.shape
    assert out.dtype == x.dtype
    assert jnp.array_equal(out, ref), "mismatch vs reference reshape (metadata path)"

    # 2) Explicitly materialized copy: force the Pallas kernel even at this
    #    tiny size (min_copy_bytes=0) so the kernel path is exercised/verified.
    out_k = jax.block_until_ready(
        reshape_pallas(x, (16, 64), materialize=True, min_copy_bytes=0))
    assert out_k.shape == (2, 16, 64), out_k.shape
    assert out_k.dtype == x.dtype
    assert jnp.array_equal(out_k, ref), "mismatch vs reference reshape (kernel path)"

    print("KERNEL_OK")
</pallas_src>

<mosaic_0001>
module attributes {stable_mosaic.version = 11 : i64} {
  func.func @_copy_kernel(%arg0: i32, %arg1: memref<2x1024xf32, #tpu.memory_space<vmem>>, %arg2: memref<2x1024xf32, #tpu.memory_space<vmem>>) attributes {dimension_semantics = [#tpu.dimension_semantics<parallel>], iteration_bounds = array<i64: 1>, scalar_prefetch = 0 : i64, scratch_operands = 0 : i64, tpu.core_type = #tpu.core_type<tc>, window_params = [{transform_indices = @transform_0, window_bounds = array<i64: 2, 1024>}, {transform_indices = @transform_1, window_bounds = array<i64: 2, 1024>}]} {
    %c0 = arith.constant 0 : index
    %c0_0 = arith.constant 0 : index
    %0 = vector.load %arg1[%c0, %c0_0] : memref<2x1024xf32, #tpu.memory_space<vmem>>, vector<2x1024xf32>
    %c0_1 = arith.constant 0 : index
    %c0_2 = arith.constant 0 : index
    %1 = vector.load %arg2[%c0_1, %c0_2] : memref<2x1024xf32, #tpu.memory_space<vmem>>, vector<2x1024xf32>
    tpu.vector_store %arg2[%c0_1, %c0_2], %0 {strides = array<i32>} : memref<2x1024xf32, #tpu.memory_space<vmem>>, vector<2x1024xf32>,
    return
  }
  func.func @transform_0(%arg0: i32) -> (i32, i32) {
    %c0_i32 = arith.constant 0 : i32
    %c0_i32_0 = arith.constant 0 : i32
    return %arg0, %c0_i32 : i32, i32
  }
  func.func @transform_1(%arg0: i32) -> (i32, i32) {
    %c0_i32 = arith.constant 0 : i32
    %c0_i32_0 = arith.constant 0 : i32
    return %arg0, %c0_i32 : i32, i32
  }
}

</mosaic_0001>

<llo_original>
// kernel: tpu_custom_call.1
$region0: #{tpu_custom_call.1}
  #allocation0 [shape = 'u32[]', space=smem, size = 0x4, offset = 0x4, fixed_abs, tag = 'smem constant byte address 0x4 - core index']
  #allocation1 [shape = 'u32[144,128]{1,0:T(1,128)}', space=vmem, size = 0x12000, scoped, tag = 'internal scratch']
  %s0 = inlined_call_operand.hbm [shape: f32[2,1024], index: 0, kind: input, shape index: {}]
  %s1 = inlined_call_operand.hbm [shape: f32[2,1024], index: 1, kind: output, shape index: {}]
  %s2 = sld [smem:[#allocation0]]
  $region18: #{tpu_custom_call.1} parent=0
    _
  %s4 = ssub.s32 1, %s2
  %s5 = scalar_select 0, %s4, %s2
  $region1: #{tpu_custom_call.1} parent=0
    #allocation2 [shape = 'u8[8192]{0}', space=vmem, size = 0x2000, scoped, tag = 'input window, operand 0, single buffered']
    #allocation3 [shape = 's32[1]{0}', space=sflag, size = 0x4, scoped, tag = 'scoped memory for tpu_custom_call.1']
    #allocation4 [shape = 's32[1]{0}', space=sflag, size = 0x4, scoped, tag = 'scoped memory for tpu_custom_call.1']
    #allocation5 [shape = 'u8[8192]{0}', space=vmem, size = 0x2000, scoped, tag = 'output window, operand 0, single buffered']
    %6 = vsyncpa [#allocation3], 0
    %7 = vsyncpa [#allocation4], 0
    // Predicated region
    $region2: #{tpu_custom_call.1} parent=1 // pred_check
      _
    $region3: #{tpu_custom_call.1} parent=1 // pred_check_branch
      %9 = sbr.rel (0) target = $region5
    $region4: #{tpu_custom_call.1} parent=1 // pred_region
      %s11 = ssub.s32 256, 256
      %12 = vsyncadd [#allocation3], %s11
      %s14 = sshll.u32 [#allocation2], 4
      %s15 = int_to_ptr.vmem [resolvable:$true] %s14
      %17 = dma.hbm_to_vmem [thread:$0]  %s0, 256, %s15, [#allocation3]
    $region5: #{tpu_custom_call.1} parent=1 // pred_fallthru
      _
    // Predicated region
    $region6: #{tpu_custom_call.1} parent=1 // pred_check
      _
    $region7: #{tpu_custom_call.1} parent=1 // pred_check_branch
      %19 = sbr.rel (0) target = $region9
    $region8: #{tpu_custom_call.1} parent=1 // pred_region
      %20 = dma.done [#allocation3], 256
    $region9: #{tpu_custom_call.1} parent=1 // pred_fallthru
      _
    %v21 = vld [vmem:[#allocation2] sm:$0xff]
    %v22 = vld [vmem:[#allocation2 + $0x8] sm:$0xff]
    %23 = vst [vmem:[#allocation5] sm:$0xff] %v21
    %24 = vst [vmem:[#allocation5 + $0x8] sm:$0xff] %v22
    // Predicated region
    $region10: #{tpu_custom_call.1} parent=1 // pred_check
      _
    $region11: #{tpu_custom_call.1} parent=1 // pred_check_branch
      %26 = sbr.rel (0) target = $region13
    $region12: #{tpu_custom_call.1} parent=1 // pred_region
      %s28 = ssub.s32 256, 256
      %29 = vsyncadd [#allocation4], %s28
      %s31 = sshll.u32 [#allocation5], 4
      %s32 = int_to_ptr.vmem [resolvable:$true] %s31
      %34 = dma.vmem_to_hbm [thread:$0]  %s32, 256, %s1, [#allocation4]
    $region13: #{tpu_custom_call.1} parent=1 // pred_fallthru
      _
    // Predicated region
    $region14: #{tpu_custom_call.1} parent=1 // pred_check
      _
    $region15: #{tpu_custom_call.1} parent=1 // pred_check_branch
      %36 = sbr.rel (0) target = $region17
    $region16: #{tpu_custom_call.1} parent=1 // pred_region
      %37 = dma.done [#allocation4], 256
    $region17: #{tpu_custom_call.1} parent=1 // pred_fallthru
      _
    %38 = vsyncpa [#allocation3], 1
    %39 = vsyncpa [#allocation4], 1

</llo_original>
